<compile_context>
chip_gen: v6e
topology: v6e:2x2x1
jax: 0.10.0
libtpu: 0.0.40
codegen_flags: <defaults>
</compile_context>

<pallas_src>
import math
import numpy as np
import jax
import jax.numpy as jnp
from jax.experimental import pallas as pl
from jax.experimental.pallas import tpu as pltpu


# ---------------------------------------------------------------------------
# Tunables (see performance notes above).
# ---------------------------------------------------------------------------
_TILE_TARGET_BYTES = 8 << 20          # ~8 MiB output row tiles (v7x/v6e/v5e)
_MIN_PALLAS_BYTES = 512 << 10         # levels smaller than this skip pallas
_SPLIT_FOR_MEGACORE_BYTES = 2 << 20   # levels bigger than this get >=2 tiles
_VMEM_LIMIT_BYTES = 40 << 20          # 2 x 8 MiB double-buffered out + headroom


# ---------------------------------------------------------------------------
# Base-anchor setup (glue, plain numpy — mirrors generate_anchors exactly)
# ---------------------------------------------------------------------------
def generate_anchors(base_size, ratios, scales):
    ratios = np.asarray(ratios, dtype=np.float64)
    scales = np.asarray(scales, dtype=np.float64)
    num_anchors = len(ratios) * len(scales)
    anchors = np.zeros((num_anchors, 4))
    anchors[:, 2:] = base_size * np.tile(scales, (2, len(ratios))).T
    areas = anchors[:, 2] * anchors[:, 3]
    anchors[:, 2] = np.sqrt(areas / np.repeat(ratios, len(scales)))
    anchors[:, 3] = anchors[:, 2] * np.repeat(ratios, len(scales))
    anchors[:, 0::2] -= np.tile(anchors[:, 2] * 0.5, (2, 1)).T
    anchors[:, 1::2] -= np.tile(anchors[:, 3] * 0.5, (2, 1)).T
    return anchors.astype(np.float32)


# ---------------------------------------------------------------------------
# Host-side per-level constants: (2, L) where L = fw*A*4
#   row 0 (base):  anchors[a,c] + stride//2 + (x*stride if c even else 0)
#   row 1 (ystep): stride if c odd else 0
# so out[y, :] = base + y*ystep reproduces coords_fmap2orig + shift exactly.
# NOTE: stride//2 (integer floor) matches the PyTorch reference — do not
# "fix" it to stride/2.
# ---------------------------------------------------------------------------
def _level_params(anchors_np, fw, stride):
    A = anchors_np.shape[0]
    L = fw * A * 4
    half = float(stride // 2)
    xs = np.arange(fw, dtype=np.float32) * float(stride)
    x_mask = np.array([1.0, 0.0, 1.0, 0.0], dtype=np.float32)   # x -> coords 0,2
    y_mask = np.array([0.0, 1.0, 0.0, 1.0], dtype=np.float32)   # y -> coords 1,3
    base = (anchors_np[None, :, :] + half
            + xs[:, None, None] * x_mask[None, None, :])        # (fw, A, 4)
    ystep = np.broadcast_to(y_mask * float(stride), (fw, A, 4))
    params = np.stack([base.reshape(L), ystep.reshape(L)], axis=0)  # (2, L)
    return jnp.asarray(params, dtype=jnp.float32), L


# ---------------------------------------------------------------------------
# Pallas kernel: one row tile of one pyramid level (lane-dense output).
# ---------------------------------------------------------------------------
def _level_kernel(rows_per_tile):
    T = rows_per_tile

    def kernel(params_ref, out_ref):
        # params_ref: (2, L) f32  -- row 0 = base, row 1 = per-row y step
        # out_ref:    (T, L) f32  -- lane-dense output tile (full level width)
        row0 = pl.program_id(0) * T
        r = (jax.lax.broadcasted_iota(jnp.int32, (T, 1), 0) + row0).astype(jnp.float32)
        out_ref[...] = params_ref[0:1, :] + r * params_ref[1:2, :]

    return kernel


def _choose_row_tile(fh, lane_width, tile_target_bytes):
    """Pick the row-tile height T (multiple of 8, or the full level)."""
    row_bytes = lane_width * 4
    level_bytes = fh * row_bytes
    t = max(1, tile_target_bytes // row_bytes)
    if t >= fh:
        # Whole level would be one tile.  dimension_semantics=("parallel",)
        # only shards across v7x's two TensorCores with >= 2 grid steps, so
        # split mid-size levels (> ~2 MiB) into two row tiles.
        if level_bytes > _SPLIT_FOR_MEGACORE_BYTES and fh > 8:
            half = (fh + 1) // 2
            return min(fh, ((half + 7) // 8) * 8)
        return fh
    return min(max(8, (t // 8) * 8), fh)


def shift_level(anchors_np, fh, fw, stride, *,
                tile_target_bytes=_TILE_TARGET_BYTES,
                min_pallas_bytes=_MIN_PALLAS_BYTES):
    """One pyramid level, returned as a (fh*fw, A*4) block (wide layout)."""
    A = anchors_np.shape[0]
    params, L = _level_params(anchors_np, fw, stride)
    level_bytes = fh * L * 4

    if level_bytes < min_pallas_bytes:
        # Tiny level: pallas launch + per-step overhead exceeds the DMA time.
        y = jnp.arange(fh, dtype=jnp.float32)[:, None]
        out2d = params[0:1, :] + y * params[1:2, :]                 # (fh, L)
    else:
        T = _choose_row_tile(fh, L, tile_target_bytes)
        out2d = pl.pallas_call(
            _level_kernel(T),
            grid=(pl.cdiv(fh, T),),
            in_specs=[pl.BlockSpec((2, L), lambda i: (0, 0))],
            out_specs=pl.BlockSpec((T, L), lambda i: (i, 0)),
            out_shape=jax.ShapeDtypeStruct((fh, L), jnp.float32),
            compiler_params=pltpu.CompilerParams(
                dimension_semantics=("parallel",),
                vmem_limit_bytes=_VMEM_LIMIT_BYTES),
        )(params)

    # (fh, fw*A*4) row-major == torch's (y, x, anchor, coord) ordering.
    # Keep the level in the shared 36-lane-wide layout; the narrow (-1, 4)
    # reshape happens exactly once, after the concat across levels.
    return out2d.reshape(fh * fw, A * 4)


# ---------------------------------------------------------------------------
# Module wrapper
# ---------------------------------------------------------------------------
class HorizontalGenerator:
    def __init__(self, ratios, scales, strides, sizes, *,
                 tile_target_bytes=_TILE_TARGET_BYTES,
                 min_pallas_bytes=_MIN_PALLAS_BYTES):
        self.ratios = np.array(ratios)
        self.scales = np.array(eval(scales))  # module evals the scales string
        self.sizes = sizes
        self.strides = strides
        self._tile_target_bytes = tile_target_bytes
        self._min_pallas_bytes = min_pallas_bytes
        self._cache = {}   # (H, W) -> concatenated (N, 4) anchors

    def _build(self, H, W):
        level_blocks = []
        for size, stride in zip(self.sizes, self.strides):
            fh = math.ceil(H / stride)
            fw = math.ceil(W / stride)
            anchors = generate_anchors(size, self.ratios, self.scales)
            level_blocks.append(
                shift_level(anchors, fh, fw, stride,
                            tile_target_bytes=self._tile_target_bytes,
                            min_pallas_bytes=self._min_pallas_bytes))
        # Single concat in the wide (.., A*4) layout, then the one unavoidable
        # narrow reshape to the module's (N, 4) contract.
        all_wide = jnp.concatenate(level_blocks, axis=0)
        return all_wide.reshape(-1, 4)

    def __call__(self, image):
        # Output depends only on spatial dims, never on image values: cache it.
        H, W = image.shape[2], image.shape[3]
        key = (H, W)
        cached = self._cache.get(key)
        if cached is None:
            cached = self._build(H, W)
            self._cache[key] = cached
        return cached


# ---------------------------------------------------------------------------
# Pure-numpy reference (semantics of the PyTorch forward)
# ---------------------------------------------------------------------------
def ref_forward(image_shape, ratios, scales, strides, sizes):
    H, W = image_shape[2], image_shape[3]
    outs = []
    for size, stride in zip(sizes, strides):
        fh = math.ceil(H / stride)
        fw = math.ceil(W / stride)
        anchors = generate_anchors(size, np.array(ratios), np.array(eval(scales)))
        shifts_x = np.arange(0, fw, dtype=np.float32) * stride
        shifts_y = np.arange(0, fh, dtype=np.float32) * stride
        sy, sx = np.meshgrid(shifts_y, shifts_x, indexing="ij")
        coords = np.stack(
            [sx.ravel(), sy.ravel(), sx.ravel(), sy.ravel()], -1
        ).astype(np.float32) + (stride // 2)
        out = (coords[:, None, :] + anchors[None, :, :]).reshape(-1, 4)
        outs.append(out)
    return np.concatenate(outs, axis=0)


if __name__ == "__main__":
    key = jax.random.PRNGKey(0)

    ratios = [0.5, 1, 2]
    scales = "[2 ** 0, 2 ** (1.0 / 3.0), 2 ** (2.0 / 3.0)]"
    strides = [8, 16]
    sizes = [32, 64]

    # --- Test 1: small image, default settings (tiny levels -> jnp bypass),
    #     plus the per-(H, W) cache on a repeated call. ------------------------
    image = jax.random.normal(key, (2, 4, 32, 32), dtype=jnp.float32)
    gen = HorizontalGenerator(ratios, scales, strides, sizes)
    out = jax.block_until_ready(gen(image))
    ref = ref_forward(image.shape, ratios, scales, strides, sizes)
    assert out.shape == ref.shape, (out.shape, ref.shape)
    np.testing.assert_allclose(np.asarray(out), ref, rtol=1e-6, atol=1e-5)
    out_again = gen(image)
    assert out_again is out, "per-(H, W) anchor cache was not hit"

    # --- Test 2: force the Pallas path with a multi-step grid and a partial
    #     last row tile (fh=20, T=8 -> tiles of 8, 8, 4 rows), still at a
    #     small image size. ---------------------------------------------------
    image2 = jax.random.normal(key, (1, 3, 160, 160), dtype=jnp.float32)
    gen_pallas = HorizontalGenerator(ratios, scales, strides, sizes,
                                     tile_target_bytes=16 << 10,
                                     min_pallas_bytes=0)
    out2 = jax.block_until_ready(gen_pallas(image2))
    ref2 = ref_forward(image2.shape, ratios, scales, strides, sizes)
    assert out2.shape == ref2.shape, (out2.shape, ref2.shape)
    np.testing.assert_allclose(np.asarray(out2), ref2, rtol=1e-6, atol=1e-5)

    print("KERNEL_OK")
</pallas_src>

<mosaic_0001>
module attributes {stable_mosaic.version = 11 : i64} {
  func.func @kernel(%arg0: i32, %arg1: memref<2x720xf32, #tpu.memory_space<vmem>>, %arg2: memref<8x720xf32, #tpu.memory_space<vmem>>) attributes {dimension_semantics = [#tpu.dimension_semantics<parallel>], iteration_bounds = array<i64: 3>, scalar_prefetch = 0 : i64, scratch_operands = 0 : i64, tpu.core_type = #tpu.core_type<tc>, window_params = [{pipeline_mode = #tpu.pipeline_mode<synchronous>, transform_indices = @transform_0, window_bounds = array<i64: 2, 720>}, {transform_indices = @transform_1, window_bounds = array<i64: 8, 720>}]} {
    %c8_i32 = arith.constant 8 : i32
    %0 = arith.muli %arg0, %c8_i32 : i32
    %1 = tpu.iota {dimensions = array<i32: 0>} : vector<8x1xi32>
    %2 = vector.broadcast %0 : i32 to vector<8x1xi32>
    %3 = arith.addi %1, %2 : vector<8x1xi32>
    %4 = arith.sitofp %3 : vector<8x1xi32> to vector<8x1xf32>
    %c0 = arith.constant 0 : index
    %c0_0 = arith.constant 0 : index
    %5 = vector.load %arg1[%c0, %c0_0] : memref<2x720xf32, #tpu.memory_space<vmem>>, vector<1x720xf32>
    %c1 = arith.constant 1 : index
    %c0_1 = arith.constant 0 : index
    %6 = vector.load %arg1[%c1, %c0_1] : memref<2x720xf32, #tpu.memory_space<vmem>>, vector<1x720xf32>
    %7 = vector.broadcast %4 : vector<8x1xf32> to vector<8x720xf32>
    %8 = vector.broadcast %6 : vector<1x720xf32> to vector<8x720xf32>
    %9 = arith.mulf %7, %8 : vector<8x720xf32>
    %10 = vector.broadcast %5 : vector<1x720xf32> to vector<8x720xf32>
    %11 = arith.addf %10, %9 : vector<8x720xf32>
    %c0_2 = arith.constant 0 : index
    %c0_3 = arith.constant 0 : index
    %12 = vector.load %arg2[%c0_2, %c0_3] : memref<8x720xf32, #tpu.memory_space<vmem>>, vector<8x720xf32>
    tpu.vector_store %arg2[%c0_2, %c0_3], %11 {strides = array<i32>} : memref<8x720xf32, #tpu.memory_space<vmem>>, vector<8x720xf32>,
    return
  }
  func.func @transform_0(%arg0: i32) -> (i32, i32) {
    %c0_i32 = arith.constant 0 : i32
    %c0_i32_0 = arith.constant 0 : i32
    %c0_i32_1 = arith.constant 0 : i32
    return %c0_i32, %c0_i32_0 : i32, i32
  }
  func.func @transform_1(%arg0: i32) -> (i32, i32) {
    %c0_i32 = arith.constant 0 : i32
    %c0_i32_0 = arith.constant 0 : i32
    return %arg0, %c0_i32 : i32, i32
  }
}

</mosaic_0001>

<llo_original>
// kernel: tpu_custom_call.1
$region0: #{tpu_custom_call.1}
  #allocation0 [shape = 'u32[]', space=smem, size = 0x4, offset = 0x4, fixed_abs, tag = 'smem constant byte address 0x4 - core index']
  #allocation1 [shape = 'u32[144,128]{1,0:T(1,128)}', space=vmem, size = 0x12000, scoped, tag = 'internal scratch']
  %s0 = inlined_call_operand.hbm [shape: f32[2,720], index: 0, kind: input, shape index: {}]
  %s1 = inlined_call_operand.hbm [shape: f32[20,720], index: 1, kind: output, shape index: {}]
  %s2 = sld [smem:[#allocation0]]
  $region41: #{tpu_custom_call.1} parent=0
    _
  %s4 = ssub.s32 1, %s2
  %s5 = scalar_select 0, %s4, %s2
  $region1: #{tpu_custom_call.1} parent=0
    #allocation2 [shape = 'u8[6144]{0}', space=vmem, size = 0x1800, scoped, tag = 'input window, operand 0, single buffered']
    #allocation3 [shape = 's32[2]{0}', space=sflag, size = 0x8, scoped, tag = 'scoped memory for tpu_custom_call.1']
    #allocation4 [shape = 's32[2]{0}', space=sflag, size = 0x8, scoped, tag = 'scoped memory for tpu_custom_call.1']
    #allocation5 [shape = 'u8[49152]{0}', space=vmem, size = 0xc000, scoped, tag = 'output window, operand 0']
    %6 = vsyncpa [#allocation3], 0
    %7 = vsyncpa [#allocation4], 0
    %s8 = scalar_lea.sflag [#allocation4], 1
    %9 = vsyncpa %s8, 0
    loop: start=0, step=1, limit=5
    $region2: #{tpu_custom_call.1} parent=1 // loop_pre_header
      _
    $region3: #{tpu_custom_call.1} parent=1 // loop_header
      %s11 = sphi 0, %s15
      %p12 = scmp.ge.s32.totalorder %s11, 5
      %s19 = sphi 0, %s19
      %s21 = sphi 0, %s19
      %s22 = sphi 0, %s21
      %s36 = sphi 0, %s22
      %s42 = sphi 0, %s44
      %s45 = sphi 0, %s42
      %s46 = sphi 0, %s45
      %s62 = sphi 0, %s46
    $region4: #{tpu_custom_call.1} parent=1 // loop_header_branch
      %14 = sbr.rel (%p12) target = $region8
    $region5: #{tpu_custom_call.1} parent=1 // loop_body
      %s16 = ssub.s32 %s11, 1
      %s17 = ssub.s32 %s11, 2
      %s18 = sadd.s32 %s11, 1
      %s20 = sadd.s32 %s19, 1
      %p23 = scmp.eq.s32.totalorder %s11, 2
      %p24 = scmp.ne.s32.totalorder %s19, %s21
      %p25 = scmp.eq.s32.totalorder %s11, 0
      %p26 = por %p24, %p25
      %p27 = scmp.ne.s32.totalorder %s19, %s21
      %p28 = scmp.eq.s32.totalorder %s16, 2
      %p29 = por %p27, %p28
      %p30 = scmp.ne.s32.totalorder %s21, %s22
      %p31 = scmp.eq.s32.totalorder %s16, 0
      %p32 = por %p30, %p31
      %p33 = scmp.ne.s32.totalorder %s21, %s22
      %p34 = scmp.eq.s32.totalorder %s17, 2
      %p35 = por %p33, %p34
      %p37 = scmp.ne.s32.totalorder %s22, %s36
      %p38 = scmp.eq.s32.totalorder %s17, 0
      %p39 = por %p37, %p38
      %s40 = ssub.s32 %s11, %s18
      %p41 = scmp.eq.s32.totalorder %s40, 0
      %s43 = sadd.s32 %s42, 1
      %s44 = scalar_select %p41, %s42, %s43
      %p47 = pneg %p41
      %p48 = scmp.eq.s32.totalorder %s11, 2
      %p49 = por %p47, %p48
      %p50 = scmp.ne.s32.totalorder %s42, %s45
      %p51 = scmp.eq.s32.totalorder %s11, 0
      %p52 = por %p50, %p51
      %p53 = scmp.ne.s32.totalorder %s42, %s45
      %p54 = scmp.eq.s32.totalorder %s16, 2
      %p55 = por %p53, %p54
      %p56 = scmp.ne.s32.totalorder %s45, %s46
      %p57 = scmp.eq.s32.totalorder %s16, 0
      %p58 = por %p56, %p57
      %p59 = scmp.ne.s32.totalorder %s45, %s46
      %p60 = scmp.eq.s32.totalorder %s17, 2
      %p61 = por %p59, %p60
      %p63 = scmp.ne.s32.totalorder %s46, %s62
      %p64 = scmp.eq.s32.totalorder %s17, 0
      %p65 = por %p63, %p64
      %p66 = scmp.le.s32.totalorder 1, %s11
      %p67 = scmp.lt.s32.totalorder %s11, 4
      %p68 = pnand %p66, %p67
      %p69 = pneg %p68
      // Predicated region
      $region9: #{tpu_custom_call.1} parent=5 // pred_check
        _
      $region10: #{tpu_custom_call.1} parent=5 // pred_check_branch
        %71 = sbr.rel (%p68) target = $region12
      $region11: #{tpu_custom_call.1} parent=5 // pred_region
        %s72 = ssub.s32 %s11, 1
        // Predicated region
        $region13: #{tpu_custom_call.1} parent=11 // pred_check
          %p73 = pneg %p32
        $region14: #{tpu_custom_call.1} parent=11 // pred_check_branch
          %75 = sbr.rel (%p73) target = $region16
        $region15: #{tpu_custom_call.1} parent=11 // pred_region
          %s77 = ssub.s32 192, 192
          %78 = vsyncadd [#allocation3], %s77
          %s80 = sshll.u32 [#allocation2], 4
          %s81 = int_to_ptr.vmem [resolvable:$true] %s80
          %83 = dma.hbm_to_vmem [thread:$0]  %s0, 192, %s81, [#allocation3]
        $region16: #{tpu_custom_call.1} parent=11 // pred_fallthru
          _
      $region12: #{tpu_custom_call.1} parent=5 // pred_fallthru
        _
      %p84 = scmp.lt.s32.totalorder %s11, 3
      // Predicated region
      $region17: #{tpu_custom_call.1} parent=5 // pred_check
        %p85 = pneg %p84
      $region18: #{tpu_custom_call.1} parent=5 // pred_check_branch
        %87 = sbr.rel (%p85) target = $region20
      $region19: #{tpu_custom_call.1} parent=5 // pred_region
        _
      $region20: #{tpu_custom_call.1} parent=5 // pred_fallthru
        _
      %p88 = scmp.le.s32.totalorder 1, %s11
      %p89 = scmp.lt.s32.totalorder %s11, 4
      %p90 = pnand %p88, %p89
      %p91 = pneg %p90
      // Predicated region
      $region21: #{tpu_custom_call.1} parent=5 // pred_check
        _
      $region22: #{tpu_custom_call.1} parent=5 // pred_check_branch
        %93 = sbr.rel (%p90) target = $region24
      $region23: #{tpu_custom_call.1} parent=5 // pred_region
        %s94 = ssub.s32 %s11, 1
        // Predicated region
        $region25: #{tpu_custom_call.1} parent=23 // pred_check
          %p95 = pneg %p32
        $region26: #{tpu_custom_call.1} parent=23 // pred_check_branch
          %97 = sbr.rel (%p95) target = $region28
        $region27: #{tpu_custom_call.1} parent=23 // pred_region
          %98 = dma.done [#allocation3], 192
        $region28: #{tpu_custom_call.1} parent=23 // pred_fallthru
          _
        %p99 = pneg %p32
        %p100 = pneg %p29
        %p101 = pneg %p58
        %p102 = pneg %p55
        %s103 = sand.u32 %s45, 1
        %s104 = scalar_lea.sflag [#allocation4], %s103
        %s105 = sand.u32 %s45, 1
        %s106 = smul.addr %s105, 48
        %s107 = scalar_lea.vmem [#allocation5], %s106
        %s108 = smul.u32 %s16, 8
        %v109 = vlaneseq
        %v110 = vshrl.u32 %v109, 7
        %v111 = vstv %s108
        %v112 = vadd.s32 %v110, %v111
        %v113 = vcvt.s32.f32 %v112
        %v114 = vld [vmem:[#allocation2] ss:$2 sm:$0x3f]
        %s115 = scalar_lea.vmem [#allocation2], 1
        %v116 = vld [vmem:[%s115] ss:$2 sm:$0x3f]
        %v118 = vlaneseq
        %v119 = vshrl.u32 %v118, 7
        %v120 = vsub.s32 0, %v119
        %v121 = vrot.slane %v116, %v120
        %v122 = vlaneseq
        %v123 = vshrl.u32 %v122, 7
        %v124 = vsub.s32 1, %v123
        %v125 = vrot.slane %v116, %v124
        %v126 = vlaneseq
        %v127 = vshrl.u32 %v126, 7
        %v128 = vsub.s32 2, %v127
        %v129 = vrot.slane %v116, %v128
        %v130 = vlaneseq
        %v131 = vshrl.u32 %v130, 7
        %v132 = vsub.s32 3, %v131
        %v133 = vrot.slane %v116, %v132
        %v134 = vlaneseq
        %v135 = vshrl.u32 %v134, 7
        %v136 = vsub.s32 4, %v135
        %v137 = vrot.slane %v116, %v136
        %v138 = vlaneseq
        %v139 = vshrl.u32 %v138, 7
        %v140 = vsub.s32 5, %v139
        %v141 = vrot.slane %v116, %v140
        %v148 = vmul.f32 %v113, %v121
        %v149 = vmul.f32 %v113, %v125
        %v150 = vmul.f32 %v113, %v129
        %v151 = vmul.f32 %v113, %v133
        %v152 = vmul.f32 %v113, %v137
        %v153 = vmul.f32 %v113, %v141
        %v155 = vlaneseq
        %v156 = vshrl.u32 %v155, 7
        %v157 = vsub.s32 0, %v156
        %v158 = vrot.slane %v114, %v157
        %v159 = vlaneseq
        %v160 = vshrl.u32 %v159, 7
        %v161 = vsub.s32 1, %v160
        %v162 = vrot.slane %v114, %v161
        %v163 = vlaneseq
        %v164 = vshrl.u32 %v163, 7
        %v165 = vsub.s32 2, %v164
        %v166 = vrot.slane %v114, %v165
        %v167 = vlaneseq
        %v168 = vshrl.u32 %v167, 7
        %v169 = vsub.s32 3, %v168
        %v170 = vrot.slane %v114, %v169
        %v171 = vlaneseq
        %v172 = vshrl.u32 %v171, 7
        %v173 = vsub.s32 4, %v172
        %v174 = vrot.slane %v114, %v173
        %v175 = vlaneseq
        %v176 = vshrl.u32 %v175, 7
        %v177 = vsub.s32 5, %v176
        %v178 = vrot.slane %v114, %v177
        %v185 = vadd.f32 %v158, %v148
        %v186 = vadd.f32 %v162, %v149
        %v187 = vadd.f32 %v166, %v150
        %v188 = vadd.f32 %v170, %v151
        %v189 = vadd.f32 %v174, %v152
        %v190 = vadd.f32 %v178, %v153
        %191 = vst [vmem:[%s107] sm:$0xff] %v185
        %192 = vst [vmem:[%s107 + $0x8] sm:$0xff] %v186
        %193 = vst [vmem:[%s107 + $0x10] sm:$0xff] %v187
        %194 = vst [vmem:[%s107 + $0x18] sm:$0xff] %v188
        %195 = vst [vmem:[%s107 + $0x20] sm:$0xff] %v189
        %vm196 = vcmask 654336
        %197 = vst.msk [vmem:[%s107 + $0x28] sm:$0xff] %vm196, %v190
        %s198 = sand.u32 %s45, 1
        %s199 = scalar_lea.sflag [#allocation4], %s198
        %s200 = sand.u32 %s45, 1
        %s201 = smul.addr %s200, 48
        %s202 = scalar_lea.vmem [#allocation5], %s201
        // Predicated region
        $region29: #{tpu_custom_call.1} parent=23 // pred_check
          %p203 = pneg %p55
        $region30: #{tpu_custom_call.1} parent=23 // pred_check_branch
          %205 = sbr.rel (%p203) target = $region32
        $region31: #{tpu_custom_call.1} parent=23 // pred_region
          %s207 = ssub.s32 768, 768
          %208 = vsyncadd %s199, %s207
          %s209 = smul.addr %s16, 6
          %s210 = smul.addr %s209, 128
          %s211 = scalar_lea.hbm %s1, %s210
          %s213 = sshll.u32 %s202, 4
          %s214 = int_to_ptr.vmem [resolvable:$true] %s213
          %216 = dma.vmem_to_hbm [thread:$0]  %s214, 768, %s211, %s199
        $region32: #{tpu_custom_call.1} parent=23 // pred_fallthru
          _
      $region24: #{tpu_custom_call.1} parent=5 // pred_fallthru
        _
      %p217 = scmp.le.s32.totalorder 2, %s11
      // Predicated region
      $region33: #{tpu_custom_call.1} parent=5 // pred_check
        %p218 = pneg %p217
      $region34: #{tpu_custom_call.1} parent=5 // pred_check_branch
        %220 = sbr.rel (%p218) target = $region36
      $region35: #{tpu_custom_call.1} parent=5 // pred_region
        %s221 = ssub.s32 %s11, 2
        // Predicated region
        $region37: #{tpu_custom_call.1} parent=35 // pred_check
          %p222 = pneg %p61
        $region38: #{tpu_custom_call.1} parent=35 // pred_check_branch
          %224 = sbr.rel (%p222) target = $region40
        $region39: #{tpu_custom_call.1} parent=35 // pred_region
          %s225 = sand.u32 %s46, 1
          %s226 = scalar_lea.sflag [#allocation4], %s225
          %s227 = sand.u32 %s46, 1
          %s228 = smul.addr %s227, 48
          %s229 = scalar_lea.vmem [#allocation5], %s228
          %230 = dma.done %s226, 768
        $region40: #{tpu_custom_call.1} parent=35 // pred_fallthru
          _
      $region36: #{tpu_custom_call.1} parent=5 // pred_fallthru
        _
    $region6: #{tpu_custom_call.1} parent=1 // loop_footer
      %s15 = sadd.s32 1, %s11
    $region7: #{tpu_custom_call.1} parent=1 // loop_footer_branch
      %10 = sbr.rel target = $region3
    $region8: #{tpu_custom_call.1} parent=1 // loop_exit
      _
    %231 = vsyncpa [#allocation3], 1
    %s232 = scalar_lea.sflag [#allocation3], 1
    %233 = vsyncpa %s232, 1
    %234 = vsyncpa [#allocation4], 1
    %s235 = scalar_lea.sflag [#allocation4], 1
    %236 = vsyncpa %s235, 1

</llo_original>
